<compile_context>
chip_gen: v6e
topology: v6e:2x2x1
jax: 0.10.0
libtpu: 0.0.40
codegen_flags: <defaults>
</compile_context>

<pallas_src>
import functools

import jax
import jax.numpy as jnp
from jax.experimental import pallas as pl
from jax.experimental.pallas import tpu as pltpu


def _round_up(x, m):
    return ((x + m - 1) // m) * m


# ---------------------------------------------------------------------------
# Kernel 1: single output, f32 -> accumulate directly into the output block
# (it is VMEM-resident across the k axis), no scratch needed.
# ---------------------------------------------------------------------------
def _linear_kernel_f32(h_ref, norm_ref, w_ref, b_ref, out_ref, *,
                       use_norm, apply_act):
    k = pl.program_id(2)

    @pl.when(k == 0)
    def _():
        out_ref[...] = jnp.zeros_like(out_ref)

    h = h_ref[...]
    if use_norm:
        h = h * norm_ref[...]                      # (tm, tk) * (tm, 1)
    out_ref[...] += jnp.dot(h, w_ref[...], preferred_element_type=jnp.float32)

    @pl.when(k == pl.num_programs(2) - 1)
    def _():
        y = out_ref[...] + b_ref[...]              # bias add, (tm, tn)
        if apply_act:
            y = jnp.maximum(y, 0.0)
        out_ref[...] = y


# ---------------------------------------------------------------------------
# Kernel 2: single output, generic dtype -> f32 accumulator scratch.
# ---------------------------------------------------------------------------
def _linear_kernel_acc(h_ref, norm_ref, w_ref, b_ref, out_ref, acc_ref, *,
                       use_norm, apply_act):
    k = pl.program_id(2)

    @pl.when(k == 0)
    def _():
        acc_ref[...] = jnp.zeros_like(acc_ref)

    h = h_ref[...]
    if use_norm:
        h = h * norm_ref[...]
    acc_ref[...] += jnp.dot(h, w_ref[...], preferred_element_type=jnp.float32)

    @pl.when(k == pl.num_programs(2) - 1)
    def _():
        y = acc_ref[...] + b_ref[...]
        if apply_act:
            y = jnp.maximum(y, 0.0)
        out_ref[...] = y.astype(out_ref.dtype)


# ---------------------------------------------------------------------------
# Kernel 3: fused torch.cat((pre, relu(pre)), dim=1).
# Output block is (tm, 2*out_feats); pre goes into [:, :out_feats] and the
# activated copy into [:, out_feats:], so no wrapper-side concatenate pass.
# ---------------------------------------------------------------------------
def _linear_concat_kernel(h_ref, norm_ref, w_ref, b_ref, out_ref, acc_ref, *,
                          use_norm, out_feats):
    k = pl.program_id(2)

    @pl.when(k == 0)
    def _():
        acc_ref[...] = jnp.zeros_like(acc_ref)

    h = h_ref[...]
    if use_norm:
        h = h * norm_ref[...]
    acc_ref[...] += jnp.dot(h, w_ref[...], preferred_element_type=jnp.float32)

    @pl.when(k == pl.num_programs(2) - 1)
    def _():
        pre = acc_ref[...] + b_ref[...]
        out_ref[:, :out_feats] = pre.astype(out_ref.dtype)
        out_ref[:, out_feats:] = jnp.maximum(pre, 0.0).astype(out_ref.dtype)


def node_update(h, norm, weight, bias, *, test=False, activation=True,
                concat=False, tm=None, tn=None, tk=None):
    """Pallas implementation of NodeUpdate.forward.

    h:      (N, in_feats) float32
    norm:   (N, 1) float32          (used only if test=True)
    weight: (out_feats, in_feats)   (PyTorch nn.Linear layout)
    bias:   (out_feats,)
    activation: ReLU if truthy (stand-in for `self.activation`)
    """
    N, K = h.shape
    Nout, Kin = weight.shape
    assert Kin == K
    dtype = h.dtype

    # ---- tile-size selection -------------------------------------------
    # Reduction (K) axis: cover the whole padded feature dim in one step
    # whenever it is small (typical for GCN); otherwise 512-wide steps.
    K_pad = _round_up(K, 128)
    if tk is None:
        tk = K_pad if K_pad <= 1024 else 512
    K_pad = _round_up(K_pad, tk)

    # Output-feature (j) axis: collapse to a single step when out_feats is
    # small so each h tile is read from HBM exactly once.  For very wide
    # outputs fall back to 256-wide tiles (MXU-friendly on v6e / v7x).
    if concat:
        tn = Nout                   # fused concat writes the full output row
        Nout_pad = Nout
    else:
        if tn is None:
            tn = Nout if Nout <= 512 else 256
        Nout_pad = Nout if tn == Nout else _round_up(Nout, tn)

    # Node (i) axis: large tiles amortize the ~0.35 us per-grid-step
    # overhead, but keep >= 2 i-steps when possible so both v7x TensorCores
    # get work ("parallel" axis).
    if tm is None:
        tm = 512
        while tm > 128 and N <= tm:
            tm //= 2
    M_pad = _round_up(N, tm)

    # ---- glue-layout prep (cheap, once per call) ------------------------
    w_t = weight.T                                  # (in_feats, out_feats)
    b2d = bias.reshape(1, Nout)

    if (M_pad, K_pad) != (N, K):
        h = jnp.pad(h, ((0, M_pad - N), (0, K_pad - K)))
    if M_pad != N:
        norm = jnp.pad(norm, ((0, M_pad - N), (0, 0)))
    if (K_pad, Nout_pad) != (K, Nout):
        w_t = jnp.pad(w_t, ((0, K_pad - K), (0, Nout_pad - Nout)))
    if Nout_pad != Nout:
        b2d = jnp.pad(b2d, ((0, 0), (0, Nout_pad - Nout)))

    grid = (M_pad // tm, Nout_pad // tn, K_pad // tk)

    in_specs = [
        pl.BlockSpec((tm, tk), lambda i, j, k: (i, k)),   # h
        pl.BlockSpec((tm, 1), lambda i, j, k: (i, 0)),    # norm
        pl.BlockSpec((tk, tn), lambda i, j, k: (k, j)),   # W.T
        pl.BlockSpec((1, tn), lambda i, j, k: (0, j)),    # bias
    ]
    cparams = pltpu.CompilerParams(
        dimension_semantics=("parallel", "parallel", "arbitrary"))

    if concat:
        kernel = functools.partial(_linear_concat_kernel,
                                   use_norm=test, out_feats=Nout)
        out = pl.pallas_call(
            kernel,
            out_shape=jax.ShapeDtypeStruct((M_pad, 2 * Nout), dtype),
            grid_spec=pltpu.PrefetchScalarGridSpec(
                num_scalar_prefetch=0,
                grid=grid,
                in_specs=in_specs,
                out_specs=pl.BlockSpec((tm, 2 * Nout), lambda i, j, k: (i, 0)),
                scratch_shapes=[pltpu.VMEM((tm, Nout), jnp.float32)],
            ),
            compiler_params=cparams,
        )(h, norm, w_t, b2d)
        return out[:N] if M_pad != N else out

    if dtype == jnp.float32:
        kernel = functools.partial(_linear_kernel_f32,
                                   use_norm=test, apply_act=bool(activation))
        scratch = []
    else:
        kernel = functools.partial(_linear_kernel_acc,
                                   use_norm=test, apply_act=bool(activation))
        scratch = [pltpu.VMEM((tm, tn), jnp.float32)]

    out = pl.pallas_call(
        kernel,
        out_shape=jax.ShapeDtypeStruct((M_pad, Nout_pad), dtype),
        grid_spec=pltpu.PrefetchScalarGridSpec(
            num_scalar_prefetch=0,
            grid=grid,
            in_specs=in_specs,
            out_specs=pl.BlockSpec((tm, tn), lambda i, j, k: (i, j)),
            scratch_shapes=scratch,
        ),
        compiler_params=cparams,
    )(h, norm, w_t, b2d)

    if (M_pad, Nout_pad) != (N, Nout):
        out = out[:N, :Nout]
    return out


def node_update_ref(h, norm, weight, bias, *, test=False, activation=True,
                    concat=False):
    x = h * norm if test else h
    y = x @ weight.T + bias
    if concat:
        return jnp.concatenate([y, jnp.maximum(y, 0.0)], axis=1)
    if activation:
        return jnp.maximum(y, 0.0)
    return y


if __name__ == "__main__":
    key = jax.random.PRNGKey(0)

    ok = True
    test_shapes = [
        # (N, in_feats, out_feats), list of (test, activation, concat)
        ((256, 128, 128), [(False, True, False), (True, True, False),
                           (True, False, False), (True, True, True)]),
        # non-tile-aligned shapes exercise the padding path
        ((200, 96, 72),   [(True, True, False), (False, False, False)]),
    ]

    for (N, in_feats, out_feats), cases in test_shapes:
        kh, kn, kw, kb = jax.random.split(jax.random.fold_in(key, N), 4)
        h = jax.random.normal(kh, (N, in_feats), dtype=jnp.float32)
        norm = jax.random.uniform(kn, (N, 1), dtype=jnp.float32,
                                  minval=0.1, maxval=1.0)
        # deterministic "nn.Linear" params (nn.Linear(in_feats, out_feats))
        weight = jax.random.normal(kw, (out_feats, in_feats),
                                   dtype=jnp.float32) * 0.05
        bias = jax.random.normal(kb, (out_feats,), dtype=jnp.float32) * 0.05

        for test_flag, act_flag, concat_flag in cases:
            out = node_update(h, norm, weight, bias, test=test_flag,
                              activation=act_flag, concat=concat_flag)
            out = jax.block_until_ready(out)
            ref = node_update_ref(h, norm, weight, bias, test=test_flag,
                                  activation=act_flag, concat=concat_flag)
            if not jnp.allclose(out, ref, atol=1e-4, rtol=1e-4):
                ok = False

    if ok:
        print("KERNEL_OK")
</pallas_src>

<mosaic_0001>
module attributes {stable_mosaic.version = 11 : i64} {
  func.func @_linear_kernel_f32(%arg0: i32, %arg1: i32, %arg2: i32, %arg3: memref<128x128xf32, #tpu.memory_space<vmem>>, %arg4: memref<128x1xf32, #tpu.memory_space<vmem>>, %arg5: memref<128x128xf32, #tpu.memory_space<vmem>>, %arg6: memref<1x128xf32, #tpu.memory_space<vmem>>, %arg7: memref<128x128xf32, #tpu.memory_space<vmem>>) attributes {dimension_semantics = [#tpu.dimension_semantics<parallel>, #tpu.dimension_semantics<parallel>, #tpu.dimension_semantics<arbitrary>], iteration_bounds = array<i64: 2, 1, 1>, scalar_prefetch = 0 : i64, scratch_operands = 0 : i64, tpu.core_type = #tpu.core_type<tc>, window_params = [{transform_indices = @transform_0, window_bounds = array<i64: 128, 128>}, {transform_indices = @transform_1, window_bounds = array<i64: 128, 1>}, {transform_indices = @transform_2, window_bounds = array<i64: 128, 128>}, {transform_indices = @transform_3, window_bounds = array<i64: 1, 128>}, {transform_indices = @transform_4, window_bounds = array<i64: 128, 128>}]} {
    %c0_i32 = arith.constant 0 : i32
    %0 = arith.cmpi eq, %arg2, %c0_i32 : i32
    %1 = arith.extui %0 : i1 to i32
    %c0_i32_0 = arith.constant 0 : i32
    %2 = arith.cmpi ne, %1, %c0_i32_0 : i32
    scf.if %2 {
      %cst_10 = arith.constant 0.000000e+00 : f32
      %12 = vector.broadcast %cst_10 : f32 to vector<128x128xf32>
      %c0_11 = arith.constant 0 : index
      %c0_12 = arith.constant 0 : index
      %13 = vector.load %arg7[%c0_11, %c0_12] : memref<128x128xf32, #tpu.memory_space<vmem>>, vector<128x128xf32>
      tpu.vector_store %arg7[%c0_11, %c0_12], %12 {strides = array<i32>} : memref<128x128xf32, #tpu.memory_space<vmem>>, vector<128x128xf32>,
    } else {
    }
    %c0 = arith.constant 0 : index
    %c0_1 = arith.constant 0 : index
    %3 = vector.load %arg3[%c0, %c0_1] : memref<128x128xf32, #tpu.memory_space<vmem>>, vector<128x128xf32>
    %c0_2 = arith.constant 0 : index
    %c0_3 = arith.constant 0 : index
    %4 = vector.load %arg7[%c0_2, %c0_3] : memref<128x128xf32, #tpu.memory_space<vmem>>, vector<128x128xf32>
    %c0_4 = arith.constant 0 : index
    %c0_5 = arith.constant 0 : index
    %5 = vector.load %arg5[%c0_4, %c0_5] : memref<128x128xf32, #tpu.memory_space<vmem>>, vector<128x128xf32>
    %cst = arith.constant dense<0.000000e+00> : vector<128x128xf32>
    %6 = tpu.matmul %3, %5, %cst {dimension_numbers = #tpu.dot_dimension_numbers<[1], [0], [0], [1], [0, 0, 1, 1], [], []>} : vector<128x128xf32>, vector<128x128xf32>, vector<128x128xf32> -> vector<128x128xf32>
    %7 = arith.addf %4, %6 : vector<128x128xf32>
    %c0_6 = arith.constant 0 : index
    %c0_7 = arith.constant 0 : index
    %8 = vector.load %arg7[%c0_6, %c0_7] : memref<128x128xf32, #tpu.memory_space<vmem>>, vector<128x128xf32>
    tpu.vector_store %arg7[%c0_6, %c0_7], %7 {strides = array<i32>} : memref<128x128xf32, #tpu.memory_space<vmem>>, vector<128x128xf32>,
    %c0_i32_8 = arith.constant 0 : i32
    %9 = arith.cmpi eq, %arg2, %c0_i32_8 : i32
    %10 = arith.extui %9 : i1 to i32
    %c0_i32_9 = arith.constant 0 : i32
    %11 = arith.cmpi ne, %10, %c0_i32_9 : i32
    scf.if %11 {
      %c0_10 = arith.constant 0 : index
      %c0_11 = arith.constant 0 : index
      %12 = vector.load %arg7[%c0_10, %c0_11] : memref<128x128xf32, #tpu.memory_space<vmem>>, vector<128x128xf32>
      %c0_12 = arith.constant 0 : index
      %c0_13 = arith.constant 0 : index
      %13 = vector.load %arg6[%c0_12, %c0_13] : memref<1x128xf32, #tpu.memory_space<vmem>>, vector<1x128xf32>
      %14 = vector.broadcast %13 : vector<1x128xf32> to vector<128x128xf32>
      %15 = arith.addf %12, %14 : vector<128x128xf32>
      %cst_14 = arith.constant 0.000000e+00 : f32
      %16 = vector.broadcast %cst_14 : f32 to vector<128x128xf32>
      %17 = arith.maximumf %15, %16 : vector<128x128xf32>
      %c0_15 = arith.constant 0 : index
      %c0_16 = arith.constant 0 : index
      %18 = vector.load %arg7[%c0_15, %c0_16] : memref<128x128xf32, #tpu.memory_space<vmem>>, vector<128x128xf32>
      tpu.vector_store %arg7[%c0_15, %c0_16], %17 {strides = array<i32>} : memref<128x128xf32, #tpu.memory_space<vmem>>, vector<128x128xf32>,
    } else {
    }
    return
  }
  func.func @transform_0(%arg0: i32, %arg1: i32, %arg2: i32) -> (i32, i32) {
    %c0_i32 = arith.constant 0 : i32
    return %arg0, %arg2 : i32, i32
  }
  func.func @transform_1(%arg0: i32, %arg1: i32, %arg2: i32) -> (i32, i32) {
    %c0_i32 = arith.constant 0 : i32
    %c0_i32_0 = arith.constant 0 : i32
    return %arg0, %c0_i32 : i32, i32
  }
  func.func @transform_2(%arg0: i32, %arg1: i32, %arg2: i32) -> (i32, i32) {
    %c0_i32 = arith.constant 0 : i32
    return %arg2, %arg1 : i32, i32
  }
  func.func @transform_3(%arg0: i32, %arg1: i32, %arg2: i32) -> (i32, i32) {
    %c0_i32 = arith.constant 0 : i32
    %c0_i32_0 = arith.constant 0 : i32
    return %c0_i32, %arg1 : i32, i32
  }
  func.func @transform_4(%arg0: i32, %arg1: i32, %arg2: i32) -> (i32, i32) {
    %c0_i32 = arith.constant 0 : i32
    return %arg0, %arg1 : i32, i32
  }
}

</mosaic_0001>

<llo_original>
// kernel: tpu_custom_call.1
$region0: #{tpu_custom_call.1}
  #allocation0 [shape = 'u32[]', space=smem, size = 0x4, offset = 0x4, fixed_abs, tag = 'smem constant byte address 0x4 - core index']
  #allocation1 [shape = 'u32[144,128]{1,0:T(1,128)}', space=vmem, size = 0x12000, scoped, tag = 'internal scratch']
  %s0 = inlined_call_operand.vmem [shape: f32[256,128], index: 0, kind: input, shape index: {}]
  %s1 = inlined_call_operand.vmem [shape: f32[256,1], index: 1, kind: input, shape index: {}]
  %s2 = inlined_call_operand.hbm [shape: f32[128,128], index: 2, kind: input, shape index: {}]
  %s3 = inlined_call_operand.vmem [shape: f32[1,128], index: 3, kind: input, shape index: {}]
  %s4 = inlined_call_operand.hbm [shape: f32[256,128], index: 4, kind: output, shape index: {}]
  %s5 = sld [smem:[#allocation0]]
  $region61: #{tpu_custom_call.1} parent=0
    _
  %s7 = ssub.s32 1, %s5
  %s8 = scalar_select 0, %s7, %s5
  $region1: #{tpu_custom_call.1} parent=0
    #allocation2 [shape = 'u8[65536]{0}', space=vmem, size = 0x10000, scoped, tag = 'input window, operand 2, single buffered']
    #allocation3 [shape = 's32[2]{0}', space=sflag, size = 0x8, scoped, tag = 'scoped memory for tpu_custom_call.1']
    #allocation4 [shape = 's32[2]{0}', space=sflag, size = 0x8, scoped, tag = 'scoped memory for tpu_custom_call.1']
    #allocation5 [shape = 'u8[131072]{0}', space=vmem, size = 0x20000, scoped, tag = 'output window, operand 0']
    %9 = vsyncpa [#allocation3], 0
    %10 = vsyncpa [#allocation4], 0
    %s11 = scalar_lea.sflag [#allocation4], 1
    %12 = vsyncpa %s11, 0
    loop: start=0, step=1, limit=4
    $region2: #{tpu_custom_call.1} parent=1 // loop_pre_header
      _
    $region3: #{tpu_custom_call.1} parent=1 // loop_header
      %s14 = sphi 0, %s18
      %p15 = scmp.ge.s32.totalorder %s14, 4
      %s21 = sphi 0, %s40
      %s22 = sphi 0, %s36
      %s23 = sphi 0, %s32
      %s24 = sphi 0, %s21
      %s25 = sphi 0, %s22
      %s26 = sphi 0, %s23
      %s27 = sphi 0, %s24
      %s28 = sphi 0, %s25
      %s29 = sphi 0, %s26
      %s45 = sphi 0, %s47
      %s48 = sphi 0, %s45
      %s49 = sphi 0, %s48
      %s65 = sphi 0, %s49
      %s71 = sphi 0, %s73
      %s74 = sphi 0, %s71
      %s75 = sphi 0, %s74
      %s91 = sphi 0, %s75
      %s99 = sphi 0, %s101
      %s102 = sphi 0, %s99
      %s103 = sphi 0, %s102
      %s119 = sphi 0, %s103
      %s125 = sphi 0, %s127
      %s128 = sphi 0, %s125
      %s129 = sphi 0, %s128
      %s145 = sphi 0, %s129
      %s153 = sphi 0, %s155
      %s156 = sphi 0, %s153
      %s157 = sphi 0, %s156
      %s173 = sphi 0, %s157
    $region4: #{tpu_custom_call.1} parent=1 // loop_header_branch
      %17 = sbr.rel (%p15) target = $region8
    $region5: #{tpu_custom_call.1} parent=1 // loop_body
      %s19 = ssub.s32 %s14, 1
      %s20 = ssub.s32 %s14, 2
      %s30 = sadd.s32 1, %s23
      %p31 = scmp.ge.s32.totalorder %s30, 1
      %s32 = scalar_select %p31, 0, %s30
      %s33 = sadd.s32 1, %s22
      %s34 = scalar_select %p31, %s33, %s22
      %p35 = scmp.ge.s32.totalorder %s34, 1
      %s36 = scalar_select %p35, 0, %s34
      %s37 = sadd.s32 1, %s21
      %s38 = scalar_select %p35, %s37, %s21
      %p39 = scmp.ge.s32.totalorder %s38, 2
      %s40 = scalar_select %p39, 0, %s38
      %s41 = ssub.s32 %s21, %s40
      %s42 = ssub.s32 %s23, %s32
      %s43 = sor.u32 %s41, %s42
      %p44 = scmp.eq.s32.totalorder %s43, 0
      %s46 = sadd.s32 %s45, 1
      %s47 = scalar_select %p44, %s45, %s46
      %p50 = pneg %p44
      %p51 = scmp.eq.s32.totalorder %s14, 1
      %p52 = por %p50, %p51
      %p53 = scmp.ne.s32.totalorder %s45, %s48
      %p54 = scmp.eq.s32.totalorder %s14, 0
      %p55 = por %p53, %p54
      %p56 = scmp.ne.s32.totalorder %s45, %s48
      %p57 = scmp.eq.s32.totalorder %s19, 1
      %p58 = por %p56, %p57
      %p59 = scmp.ne.s32.totalorder %s48, %s49
      %p60 = scmp.eq.s32.totalorder %s19, 0
      %p61 = por %p59, %p60
      %p62 = scmp.ne.s32.totalorder %s48, %s49
      %p63 = scmp.eq.s32.totalorder %s20, 1
      %p64 = por %p62, %p63
      %p66 = scmp.ne.s32.totalorder %s49, %s65
      %p67 = scmp.eq.s32.totalorder %s20, 0
      %p68 = por %p66, %p67
      %s69 = ssub.s32 %s21, %s40
      %p70 = scmp.eq.s32.totalorder %s69, 0
      %s72 = sadd.s32 %s71, 1
      %s73 = scalar_select %p70, %s71, %s72
      %p76 = pneg %p70
      %p77 = scmp.eq.s32.totalorder %s14, 1
      %p78 = por %p76, %p77
      %p79 = scmp.ne.s32.totalorder %s71, %s74
      %p80 = scmp.eq.s32.totalorder %s14, 0
      %p81 = por %p79, %p80
      %p82 = scmp.ne.s32.totalorder %s71, %s74
      %p83 = scmp.eq.s32.totalorder %s19, 1
      %p84 = por %p82, %p83
      %p85 = scmp.ne.s32.totalorder %s74, %s75
      %p86 = scmp.eq.s32.totalorder %s19, 0
      %p87 = por %p85, %p86
      %p88 = scmp.ne.s32.totalorder %s74, %s75
      %p89 = scmp.eq.s32.totalorder %s20, 1
      %p90 = por %p88, %p89
      %p92 = scmp.ne.s32.totalorder %s75, %s91
      %p93 = scmp.eq.s32.totalorder %s20, 0
      %p94 = por %p92, %p93
      %s95 = ssub.s32 %s23, %s32
      %s96 = ssub.s32 %s22, %s36
      %s97 = sor.u32 %s95, %s96
      %p98 = scmp.eq.s32.totalorder %s97, 0
      %s100 = sadd.s32 %s99, 1
      %s101 = scalar_select %p98, %s99, %s100
      %p104 = pneg %p98
      %p105 = scmp.eq.s32.totalorder %s14, 1
      %p106 = por %p104, %p105
      %p107 = scmp.ne.s32.totalorder %s99, %s102
      %p108 = scmp.eq.s32.totalorder %s14, 0
      %p109 = por %p107, %p108
      %p110 = scmp.ne.s32.totalorder %s99, %s102
      %p111 = scmp.eq.s32.totalorder %s19, 1
      %p112 = por %p110, %p111
      %p113 = scmp.ne.s32.totalorder %s102, %s103
      %p114 = scmp.eq.s32.totalorder %s19, 0
      %p115 = por %p113, %p114
      %p116 = scmp.ne.s32.totalorder %s102, %s103
      %p117 = scmp.eq.s32.totalorder %s20, 1
      %p118 = por %p116, %p117
      %p120 = scmp.ne.s32.totalorder %s103, %s119
      %p121 = scmp.eq.s32.totalorder %s20, 0
      %p122 = por %p120, %p121
      %s123 = ssub.s32 %s22, %s36
      %p124 = scmp.eq.s32.totalorder %s123, 0
      %s126 = sadd.s32 %s125, 1
      %s127 = scalar_select %p124, %s125, %s126
      %p130 = pneg %p124
      %p131 = scmp.eq.s32.totalorder %s14, 1
      %p132 = por %p130, %p131
      %p133 = scmp.ne.s32.totalorder %s125, %s128
      %p134 = scmp.eq.s32.totalorder %s14, 0
      %p135 = por %p133, %p134
      %p136 = scmp.ne.s32.totalorder %s125, %s128
      %p137 = scmp.eq.s32.totalorder %s19, 1
      %p138 = por %p136, %p137
      %p139 = scmp.ne.s32.totalorder %s128, %s129
      %p140 = scmp.eq.s32.totalorder %s19, 0
      %p141 = por %p139, %p140
      %p142 = scmp.ne.s32.totalorder %s128, %s129
      %p143 = scmp.eq.s32.totalorder %s20, 1
      %p144 = por %p142, %p143
      %p146 = scmp.ne.s32.totalorder %s129, %s145
      %p147 = scmp.eq.s32.totalorder %s20, 0
      %p148 = por %p146, %p147
      %s149 = ssub.s32 %s21, %s40
      %s150 = ssub.s32 %s22, %s36
      %s151 = sor.u32 %s149, %s150
      %p152 = scmp.eq.s32.totalorder %s151, 0
      %s154 = sadd.s32 %s153, 1
      %s155 = scalar_select %p152, %s153, %s154
      %p158 = pneg %p152
      %p159 = scmp.eq.s32.totalorder %s14, 1
      %p160 = por %p158, %p159
      %p161 = scmp.ne.s32.totalorder %s153, %s156
      %p162 = scmp.eq.s32.totalorder %s14, 0
      %p163 = por %p161, %p162
      %p164 = scmp.ne.s32.totalorder %s153, %s156
      %p165 = scmp.eq.s32.totalorder %s19, 1
      %p166 = por %p164, %p165
      %p167 = scmp.ne.s32.totalorder %s156, %s157
      %p168 = scmp.eq.s32.totalorder %s19, 0
      %p169 = por %p167, %p168
      %p170 = scmp.ne.s32.totalorder %s156, %s157
      %p171 = scmp.eq.s32.totalorder %s20, 1
      %p172 = por %p170, %p171
      %p174 = scmp.ne.s32.totalorder %s157, %s173
      %p175 = scmp.eq.s32.totalorder %s20, 0
      %p176 = por %p174, %p175
      %p177 = scmp.le.s32.totalorder 1, %s14
      %p178 = scmp.lt.s32.totalorder %s14, 3
      %p179 = pnand %p177, %p178
      %p180 = pneg %p179
      // Predicated region
      $region9: #{tpu_custom_call.1} parent=5 // pred_check
        _
      $region10: #{tpu_custom_call.1} parent=5 // pred_check_branch
        %182 = sbr.rel (%p179) target = $region12
      $region11: #{tpu_custom_call.1} parent=5 // pred_region
        %s183 = ssub.s32 %s14, 1
        // Predicated region
        $region13: #{tpu_custom_call.1} parent=11 // pred_check
          %p184 = pneg %p115
        $region14: #{tpu_custom_call.1} parent=11 // pred_check_branch
          %186 = sbr.rel (%p184) target = $region16
        $region15: #{tpu_custom_call.1} parent=11 // pred_region
          %s187 = smul.u32 16, %s26
          %s189 = ssub.s32 2048, 2048
          %190 = vsyncadd [#allocation3], %s189
          %s191 = sadd.s32 %s25, %s187
          %s192 = smul.addr %s191, 128
          %s193 = scalar_lea.hbm %s2, %s192
          %s194 = sshll.u32 [#allocation2], 4
          %s195 = int_to_ptr.vmem [resolvable:$true] %s194
          %200 = dma.hbm_to_vmem [thread:$0]  %s193, 2048, %s195, [#allocation3], 128, 128, 8
        $region16: #{tpu_custom_call.1} parent=11 // pred_fallthru
          _
        // Predicated region
        $region17: #{tpu_custom_call.1} parent=11 // pred_check
          %p201 = pneg %p141
        $region18: #{tpu_custom_call.1} parent=11 // pred_check_branch
          %203 = sbr.rel (%p201) target = $region20
        $region19: #{tpu_custom_call.1} parent=11 // pred_region
          %p204 = scmp.lt.s32.totalorder %s25, 0
          %s205 = scalar_select %p204, %s25, 0
          %s206 = scalar_lea.vmem %s3, %s205
        $region20: #{tpu_custom_call.1} parent=11 // pred_fallthru
          _
      $region12: #{tpu_custom_call.1} parent=5 // pred_fallthru
        _
      %p207 = scmp.lt.s32.totalorder %s14, 2
      // Predicated region
      $region21: #{tpu_custom_call.1} parent=5 // pred_check
        %p208 = pneg %p207
      $region22: #{tpu_custom_call.1} parent=5 // pred_check_branch
        %210 = sbr.rel (%p208) target = $region24
      $region23: #{tpu_custom_call.1} parent=5 // pred_region
        // Predicated region
        $region25: #{tpu_custom_call.1} parent=23 // pred_check
          %p211 = pneg %p55
        $region26: #{tpu_custom_call.1} parent=23 // pred_check_branch
          %213 = sbr.rel (%p211) target = $region28
        $region27: #{tpu_custom_call.1} parent=23 // pred_region
          %s214 = smul.u32 16, %s21
          %p215 = scmp.lt.s32.totalorder %s214, 31
          %s216 = scalar_select %p215, %s214, 31
          %p217 = scmp.lt.s32.totalorder %s23, 0
          %s218 = scalar_select %p217, %s23, 0
          %s219 = sadd.s32 %s218, %s216
          %s220 = smul.addr %s219, 8
          %s221 = scalar_lea.vmem %s0, %s220
          %s222 = smul.u32 16, %s21
        $region28: #{tpu_custom_call.1} parent=23 // pred_fallthru
          _
        // Predicated region
        $region29: #{tpu_custom_call.1} parent=23 // pred_check
          %p223 = pneg %p81
        $region30: #{tpu_custom_call.1} parent=23 // pred_check_branch
          %225 = sbr.rel (%p223) target = $region32
        $region31: #{tpu_custom_call.1} parent=23 // pred_region
          %s226 = smul.u32 16, %s21
          %p227 = scmp.lt.s32.totalorder %s226, 31
          %s228 = scalar_select %p227, %s226, 31
          %s229 = smul.addr %s228, 8
          %s230 = scalar_lea.vmem %s1, %s229
          %s231 = smul.u32 16, %s21
        $region32: #{tpu_custom_call.1} parent=23 // pred_fallthru
          _
      $region24: #{tpu_custom_call.1} parent=5 // pred_fallthru
        _
      %p232 = scmp.le.s32.totalorder 1, %s14
      %p233 = scmp.lt.s32.totalorder %s14, 3
      %p234 = pnand %p232, %p233
      %p235 = pneg %p234
      // Predicated region
      $region33: #{tpu_custom_call.1} parent=5 // pred_check
        _
      $region34: #{tpu_custom_call.1} parent=5 // pred_check_branch
        %237 = sbr.rel (%p234) target = $region36
      $region35: #{tpu_custom_call.1} parent=5 // pred_region
        %s238 = ssub.s32 %s14, 1
        // Predicated region
        $region37: #{tpu_custom_call.1} parent=35 // pred_check
          %p239 = pneg %p115
        $region38: #{tpu_custom_call.1} parent=35 // pred_check_branch
          %241 = sbr.rel (%p239) target = $region40
        $region39: #{tpu_custom_call.1} parent=35 // pred_region
          %242 = dma.done [#allocation3], 2048
        $region40: #{tpu_custom_call.1} parent=35 // pred_fallthru
          _
        %s243 = smul.u32 16, %s24
        %p244 = scmp.lt.s32.totalorder %s243, 31
        %s245 = scalar_select %p244, %s243, 31
        %p246 = scmp.lt.s32.totalorder %s26, 0
        %s247 = scalar_select %p246, %s26, 0
        %s248 = sadd.s32 %s247, %s245
        %s249 = smul.addr %s248, 8
        %s250 = scalar_lea.vmem %s0, %s249
        %p251 = pneg %p61
        %p252 = pneg %p58
        %s253 = smul.u32 16, %s24
        %p254 = scmp.lt.s32.totalorder %s253, 31
        %s255 = scalar_select %p254, %s253, 31
        %s256 = smul.addr %s255, 8
        %s257 = scalar_lea.vmem %s1, %s256
        %p258 = pneg %p87
        %p259 = pneg %p84
        %p260 = pneg %p115
        %p261 = pneg %p112
        %p262 = scmp.lt.s32.totalorder %s25, 0
        %s263 = scalar_select %p262, %s25, 0
        %s264 = scalar_lea.vmem %s3, %s263
        %p265 = pneg %p141
        %p266 = pneg %p138
        %p267 = pneg %p169
        %p268 = pneg %p166
        %s269 = sand.u32 %s156, 1
        %s270 = scalar_lea.sflag [#allocation4], %s269
        %s271 = sand.u32 %s156, 1
        %s272 = smul.addr %s271, 128
        %s273 = scalar_lea.vmem [#allocation5], %s272
        %s274 = smul.u32 16, %s24
        %p275 = scmp.lt.s32.totalorder %s274, 31
        %s276 = scalar_select %p275, %s274, 31
        %p277 = scmp.lt.s32.totalorder %s26, 0
        %s278 = scalar_select %p277, %s26, 0
        %s279 = sadd.s32 %s278, %s276
        %s280 = smul.addr %s279, 8
        %s281 = scalar_lea.vmem %s0, %s280
        %s282 = smul.u32 16, %s24
        %s283 = smul.u32 16, %s24
        %p284 = scmp.lt.s32.totalorder %s283, 31
        %s285 = scalar_select %p284, %s283, 31
        %s286 = smul.addr %s285, 8
        %s287 = scalar_lea.vmem %s1, %s286
        %s288 = smul.u32 16, %s24
        %s289 = smul.u32 16, %s26
        %p290 = scmp.lt.s32.totalorder %s25, 0
        %s291 = scalar_select %p290, %s25, 0
        %s292 = scalar_lea.vmem %s3, %s291
        %s293 = smul.u32 16, %s24
        %p294 = scmp.eq.s32.totalorder %s26, 0
        // Predicated region
        $region41: #{tpu_custom_call.1} parent=35 // pred_check
          %p295 = pneg %p294
        $region42: #{tpu_custom_call.1} parent=35 // pred_check_branch
          %297 = sbr.rel (%p295) target = $region44
        $region43: #{tpu_custom_call.1} parent=35 // pred_region
          %298 = vst [vmem:[%s273] sm:$0xff] 0.0
          %299 = vst [vmem:[%s273 + $0x8] sm:$0xff] 0.0
          %300 = vst [vmem:[%s273 + $0x10] sm:$0xff] 0.0
          %301 = vst [vmem:[%s273 + $0x18] sm:$0xff] 0.0
          %302 = vst [vmem:[%s273 + $0x20] sm:$0xff] 0.0
          %303 = vst [vmem:[%s273 + $0x28] sm:$0xff] 0.0
          %304 = vst [vmem:[%s273 + $0x30] sm:$0xff] 0.0
          %305 = vst [vmem:[%s273 + $0x38] sm:$0xff] 0.0
          %306 = vst [vmem:[%s273 + $0x40] sm:$0xff] 0.0
          %307 = vst [vmem:[%s273 + $0x48] sm:$0xff] 0.0
          %308 = vst [vmem:[%s273 + $0x50] sm:$0xff] 0.0
          %309 = vst [vmem:[%s273 + $0x58] sm:$0xff] 0.0
          %310 = vst [vmem:[%s273 + $0x60] sm:$0xff] 0.0
          %311 = vst [vmem:[%s273 + $0x68] sm:$0xff] 0.0
          %312 = vst [vmem:[%s273 + $0x70] sm:$0xff] 0.0
          %313 = vst [vmem:[%s273 + $0x78] sm:$0xff] 0.0
        $region44: #{tpu_custom_call.1} parent=35 // pred_fallthru
          _
        %v314 = vld [vmem:[%s281] sm:$0xff]
        %v315 = vld [vmem:[%s281 + $0x8] sm:$0xff]
        %v316 = vld [vmem:[%s281 + $0x10] sm:$0xff]
        %v317 = vld [vmem:[%s281 + $0x18] sm:$0xff]
        %v318 = vld [vmem:[%s281 + $0x20] sm:$0xff]
        %v319 = vld [vmem:[%s281 + $0x28] sm:$0xff]
        %v320 = vld [vmem:[%s281 + $0x30] sm:$0xff]
        %v321 = vld [vmem:[%s281 + $0x38] sm:$0xff]
        %v322 = vld [vmem:[%s281 + $0x40] sm:$0xff]
        %v323 = vld [vmem:[%s281 + $0x48] sm:$0xff]
        %v324 = vld [vmem:[%s281 + $0x50] sm:$0xff]
        %v325 = vld [vmem:[%s281 + $0x58] sm:$0xff]
        %v326 = vld [vmem:[%s281 + $0x60] sm:$0xff]
        %v327 = vld [vmem:[%s281 + $0x68] sm:$0xff]
        %v328 = vld [vmem:[%s281 + $0x70] sm:$0xff]
        %v329 = vld [vmem:[%s281 + $0x78] sm:$0xff]
        %v330 = vld [vmem:[%s273] sm:$0xff]
        %v331 = vld [vmem:[%s273 + $0x8] sm:$0xff]
        %v332 = vld [vmem:[%s273 + $0x10] sm:$0xff]
        %v333 = vld [vmem:[%s273 + $0x18] sm:$0xff]
        %v334 = vld [vmem:[%s273 + $0x20] sm:$0xff]
        %v335 = vld [vmem:[%s273 + $0x28] sm:$0xff]
        %v336 = vld [vmem:[%s273 + $0x30] sm:$0xff]
        %v337 = vld [vmem:[%s273 + $0x38] sm:$0xff]
        %v338 = vld [vmem:[%s273 + $0x40] sm:$0xff]
        %v339 = vld [vmem:[%s273 + $0x48] sm:$0xff]
        %v340 = vld [vmem:[%s273 + $0x50] sm:$0xff]
        %v341 = vld [vmem:[%s273 + $0x58] sm:$0xff]
        %v342 = vld [vmem:[%s273 + $0x60] sm:$0xff]
        %v343 = vld [vmem:[%s273 + $0x68] sm:$0xff]
        %v344 = vld [vmem:[%s273 + $0x70] sm:$0xff]
        %v345 = vld [vmem:[%s273 + $0x78] sm:$0xff]
        %v346 = vld [vmem:[#allocation2] sm:$0xff]
        %v347 = vld [vmem:[#allocation2 + $0x8] sm:$0xff]
        %v348 = vld [vmem:[#allocation2 + $0x10] sm:$0xff]
        %v349 = vld [vmem:[#allocation2 + $0x18] sm:$0xff]
        %v350 = vld [vmem:[#allocation2 + $0x20] sm:$0xff]
        %v351 = vld [vmem:[#allocation2 + $0x28] sm:$0xff]
        %v352 = vld [vmem:[#allocation2 + $0x30] sm:$0xff]
        %v353 = vld [vmem:[#allocation2 + $0x38] sm:$0xff]
        %v354 = vld [vmem:[#allocation2 + $0x40] sm:$0xff]
        %v355 = vld [vmem:[#allocation2 + $0x48] sm:$0xff]
        %v356 = vld [vmem:[#allocation2 + $0x50] sm:$0xff]
        %v357 = vld [vmem:[#allocation2 + $0x58] sm:$0xff]
        %v358 = vld [vmem:[#allocation2 + $0x60] sm:$0xff]
        %v359 = vld [vmem:[#allocation2 + $0x68] sm:$0xff]
        %v360 = vld [vmem:[#allocation2 + $0x70] sm:$0xff]
        %v361 = vld [vmem:[#allocation2 + $0x78] sm:$0xff]
        %362 = vmatprep.subr.mxu0 0.0
        %363 = vmatpush1.msra.mxu0 %v361
        %364 = vmatprep.subr.mxu0 0.0
        %365 = vmatpush1.msra.mxu0 %v360
        %366 = vmatprep.subr.mxu0 0.0
        %367 = vmatpush1.msra.mxu0 %v359
        %368 = vmatprep.subr.mxu0 0.0
        %369 = vmatpush1.msra.mxu0 %v358
        %370 = vmatprep.subr.mxu0 0.0
        %371 = vmatpush1.msra.mxu0 %v357
        %372 = vmatprep.subr.mxu0 0.0
        %373 = vmatpush1.msra.mxu0 %v356
        %374 = vmatprep.subr.mxu0 0.0
        %375 = vmatpush1.msra.mxu0 %v355
        %376 = vmatprep.subr.mxu0 0.0
        %377 = vmatpush1.msra.mxu0 %v354
        %378 = vmatprep.subr.mxu0 0.0
        %379 = vmatpush1.msra.mxu0 %v353
        %380 = vmatprep.subr.mxu0 0.0
        %381 = vmatpush1.msra.mxu0 %v352
        %382 = vmatprep.subr.mxu0 0.0
        %383 = vmatpush1.msra.mxu0 %v351
        %384 = vmatprep.subr.mxu0 0.0
        %385 = vmatpush1.msra.mxu0 %v350
        %386 = vmatprep.subr.mxu0 0.0
        %387 = vmatpush1.msra.mxu0 %v349
        %388 = vmatprep.subr.mxu0 0.0
        %389 = vmatpush1.msra.mxu0 %v348
        %390 = vmatprep.subr.mxu0 0.0
        %391 = vmatpush1.msra.mxu0 %v347
        %392 = vmatprep.subr.mxu0 0.0
        %393 = vmatpush1.msra.mxu0 %v346
        %394 = vmatprep.subr.mxu0 0.0
        %395 = vmatpush2.msra.mxu0 0.0
        %396 = vmatprep.subr.mxu0 0.0
        %397 = vmatpush2.msra.mxu0 0.0
        %398 = vmatprep.subr.mxu0 0.0
        %399 = vmatpush2.msra.mxu0 0.0
        %400 = vmatprep.subr.mxu0 0.0
        %401 = vmatpush2.msra.mxu0 0.0
        %402 = vmatprep.subr.mxu0 0.0
        %403 = vmatpush2.msra.mxu0 0.0
        %404 = vmatprep.subr.mxu0 0.0
        %405 = vmatpush2.msra.mxu0 0.0
        %406 = vmatprep.subr.mxu0 0.0
        %407 = vmatpush2.msra.mxu0 0.0
        %408 = vmatprep.subr.mxu0 0.0
        %409 = vmatpush2.msra.mxu0 0.0
        %410 = vmatprep.subr.mxu0 0.0
        %411 = vmatpush2.msra.mxu0 0.0
        %412 = vmatprep.subr.mxu0 0.0
        %413 = vmatpush2.msra.mxu0 0.0
        %414 = vmatprep.subr.mxu0 0.0
        %415 = vmatpush2.msra.mxu0 0.0
        %416 = vmatprep.subr.mxu0 0.0
        %417 = vmatpush2.msra.mxu0 0.0
        %418 = vmatprep.subr.mxu0 0.0
        %419 = vmatpush2.msra.mxu0 0.0
        %420 = vmatprep.subr.mxu0 0.0
        %421 = vmatpush2.msra.mxu0 0.0
        %422 = vmatprep.subr.mxu0 0.0
        %423 = vmatpush2.msra.mxu0 0.0
        %424 = vmatprep.subr.mxu0 0.0
        %425 = vmatpush2.msra.mxu0 0.0
        %426 = vmatprep.mubr.f32.mxu0 0.0
        %427 = vmatmul.mubr.f32.gmra.mxu0 %v314
        %v428 = vpop.f32.mrf.mxu0
        %v429 = vadd.f32 0.0, %v428
        %v430 = vpop.f32.mrf.mxu0
        %431 = vmatprep.mubr.f32.mxu0 0.0
        %432 = vmatmul.mubr.f32.gmra.mxu0 %v315
        %v433 = vpop.f32.mrf.mxu0
        %v434 = vadd.f32 0.0, %v433
        %v435 = vpop.f32.mrf.mxu0
        %436 = vmatprep.mubr.f32.mxu0 0.0
        %437 = vmatmul.mubr.f32.gmra.mxu0 %v316
        %v438 = vpop.f32.mrf.mxu0
        %v439 = vadd.f32 0.0, %v438
        %v440 = vpop.f32.mrf.mxu0
        %441 = vmatprep.mubr.f32.mxu0 0.0
        %442 = vmatmul.mubr.f32.gmra.mxu0 %v317
        %v443 = vpop.f32.mrf.mxu0
        %v444 = vadd.f32 0.0, %v443
        %v445 = vpop.f32.mrf.mxu0
        %446 = vmatprep.mubr.f32.mxu0 0.0
        %447 = vmatmul.mubr.f32.gmra.mxu0 %v318
        %v448 = vpop.f32.mrf.mxu0
        %v449 = vadd.f32 0.0, %v448
        %v450 = vpop.f32.mrf.mxu0
        %451 = vmatprep.mubr.f32.mxu0 0.0
        %452 = vmatmul.mubr.f32.gmra.mxu0 %v319
        %v453 = vpop.f32.mrf.mxu0
        %v454 = vadd.f32 0.0, %v453
        %v455 = vpop.f32.mrf.mxu0
        %456 = vmatprep.mubr.f32.mxu0 0.0
        %457 = vmatmul.mubr.f32.gmra.mxu0 %v320
        %v458 = vpop.f32.mrf.mxu0
        %v459 = vadd.f32 0.0, %v458
        %v460 = vpop.f32.mrf.mxu0
        %461 = vmatprep.mubr.f32.mxu0 0.0
        %462 = vmatmul.mubr.f32.gmra.mxu0 %v321
        %v463 = vpop.f32.mrf.mxu0
        %v464 = vadd.f32 0.0, %v463
        %v465 = vpop.f32.mrf.mxu0
        %466 = vmatprep.mubr.f32.mxu0 0.0
        %467 = vmatmul.mubr.f32.gmra.mxu0 %v322
        %v468 = vpop.f32.mrf.mxu0
        %v469 = vadd.f32 0.0, %v468
        %v470 = vpop.f32.mrf.mxu0
        %471 = vmatprep.mubr.f32.mxu0 0.0
        %472 = vmatmul.mubr.f32.gmra.mxu0 %v323
        %v473 = vpop.f32.mrf.mxu0
        %v474 = vadd.f32 0.0, %v473
        %v475 = vpop.f32.mrf.mxu0
        %476 = vmatprep.mubr.f32.mxu0 0.0
        %477 = vmatmul.mubr.f32.gmra.mxu0 %v324
        %v478 = vpop.f32.mrf.mxu0
        %v479 = vadd.f32 0.0, %v478
        %v480 = vpop.f32.mrf.mxu0
        %481 = vmatprep.mubr.f32.mxu0 0.0
        %482 = vmatmul.mubr.f32.gmra.mxu0 %v325
        %v483 = vpop.f32.mrf.mxu0
        %v484 = vadd.f32 0.0, %v483
        %v485 = vpop.f32.mrf.mxu0
        %486 = vmatprep.mubr.f32.mxu0 0.0
        %487 = vmatmul.mubr.f32.gmra.mxu0 %v326
        %v488 = vpop.f32.mrf.mxu0
        %v489 = vadd.f32 0.0, %v488
        %v490 = vpop.f32.mrf.mxu0
        %491 = vmatprep.mubr.f32.mxu0 0.0
        %492 = vmatmul.mubr.f32.gmra.mxu0 %v327
        %v493 = vpop.f32.mrf.mxu0
        %v494 = vadd.f32 0.0, %v493
        %v495 = vpop.f32.mrf.mxu0
        %496 = vmatprep.mubr.f32.mxu0 0.0
        %497 = vmatmul.mubr.f32.gmra.mxu0 %v328
        %v498 = vpop.f32.mrf.mxu0
        %v499 = vadd.f32 0.0, %v498
        %v500 = vpop.f32.mrf.mxu0
        %501 = vmatprep.mubr.f32.mxu0 0.0
        %502 = vmatmul.mubr.f32.gmra.mxu0 %v329
        %v503 = vpop.f32.mrf.mxu0
        %v504 = vadd.f32 0.0, %v503
        %v505 = vpop.f32.mrf.mxu0
        %506 = vdwg.mxu0
        %v507 = vadd.f32 %v330, %v429
        %v508 = vadd.f32 %v331, %v434
        %v509 = vadd.f32 %v332, %v439
        %v510 = vadd.f32 %v333, %v444
        %v511 = vadd.f32 %v334, %v449
        %v512 = vadd.f32 %v335, %v454
        %v513 = vadd.f32 %v336, %v459
        %v514 = vadd.f32 %v337, %v464
        %v515 = vadd.f32 %v338, %v469
        %v516 = vadd.f32 %v339, %v474
        %v517 = vadd.f32 %v340, %v479
        %v518 = vadd.f32 %v341, %v484
        %v519 = vadd.f32 %v342, %v489
        %v520 = vadd.f32 %v343, %v494
        %v521 = vadd.f32 %v344, %v499
        %v522 = vadd.f32 %v345, %v504
        %523 = vst [vmem:[%s273] sm:$0xff] %v507
        %524 = vst [vmem:[%s273 + $0x8] sm:$0xff] %v508
        %525 = vst [vmem:[%s273 + $0x10] sm:$0xff] %v509
        %526 = vst [vmem:[%s273 + $0x18] sm:$0xff] %v510
        %527 = vst [vmem:[%s273 + $0x20] sm:$0xff] %v511
        %528 = vst [vmem:[%s273 + $0x28] sm:$0xff] %v512
        %529 = vst [vmem:[%s273 + $0x30] sm:$0xff] %v513
        %530 = vst [vmem:[%s273 + $0x38] sm:$0xff] %v514
        %531 = vst [vmem:[%s273 + $0x40] sm:$0xff] %v515
        %532 = vst [vmem:[%s273 + $0x48] sm:$0xff] %v516
        %533 = vst [vmem:[%s273 + $0x50] sm:$0xff] %v517
        %534 = vst [vmem:[%s273 + $0x58] sm:$0xff] %v518
        %535 = vst [vmem:[%s273 + $0x60] sm:$0xff] %v519
        %536 = vst [vmem:[%s273 + $0x68] sm:$0xff] %v520
        %537 = vst [vmem:[%s273 + $0x70] sm:$0xff] %v521
        %538 = vst [vmem:[%s273 + $0x78] sm:$0xff] %v522
        // Predicated region
        $region45: #{tpu_custom_call.1} parent=35 // pred_check
          %p539 = pneg %p294
        $region46: #{tpu_custom_call.1} parent=35 // pred_check_branch
          %541 = sbr.rel (%p539) target = $region48
        $region47: #{tpu_custom_call.1} parent=35 // pred_region
          %v542 = vld [vmem:[%s273] sm:$0xff]
          %v543 = vld [vmem:[%s273 + $0x8] sm:$0xff]
          %v544 = vld [vmem:[%s273 + $0x10] sm:$0xff]
          %v545 = vld [vmem:[%s273 + $0x18] sm:$0xff]
          %v546 = vld [vmem:[%s273 + $0x20] sm:$0xff]
          %v547 = vld [vmem:[%s273 + $0x28] sm:$0xff]
          %v548 = vld [vmem:[%s273 + $0x30] sm:$0xff]
          %v549 = vld [vmem:[%s273 + $0x38] sm:$0xff]
          %v550 = vld [vmem:[%s273 + $0x40] sm:$0xff]
          %v551 = vld [vmem:[%s273 + $0x48] sm:$0xff]
          %v552 = vld [vmem:[%s273 + $0x50] sm:$0xff]
          %v553 = vld [vmem:[%s273 + $0x58] sm:$0xff]
          %v554 = vld [vmem:[%s273 + $0x60] sm:$0xff]
          %v555 = vld [vmem:[%s273 + $0x68] sm:$0xff]
          %v556 = vld [vmem:[%s273 + $0x70] sm:$0xff]
          %v557 = vld [vmem:[%s273 + $0x78] sm:$0xff]
          %v558 = vld [vmem:[%s292] sm:$0x1]
          %v560 = vlaneseq
          %v561 = vshrl.u32 %v560, 7
          %v562 = vsub.s32 0, %v561
          %v563 = vrot.slane %v558, %v562
          %v565 = vadd.f32 %v542, %v563
          %v566 = vadd.f32 %v543, %v563
          %v567 = vadd.f32 %v544, %v563
          %v568 = vadd.f32 %v545, %v563
          %v569 = vadd.f32 %v546, %v563
          %v570 = vadd.f32 %v547, %v563
          %v571 = vadd.f32 %v548, %v563
          %v572 = vadd.f32 %v549, %v563
          %v573 = vadd.f32 %v550, %v563
          %v574 = vadd.f32 %v551, %v563
          %v575 = vadd.f32 %v552, %v563
          %v576 = vadd.f32 %v553, %v563
          %v577 = vadd.f32 %v554, %v563
          %v578 = vadd.f32 %v555, %v563
          %v579 = vadd.f32 %v556, %v563
          %v580 = vadd.f32 %v557, %v563
          %v581 = vmax.f32 %v565, 0.0
          %v582 = vmax.f32 %v566, 0.0
          %v583 = vmax.f32 %v567, 0.0
          %v584 = vmax.f32 %v568, 0.0
          %v585 = vmax.f32 %v569, 0.0
          %v586 = vmax.f32 %v570, 0.0
          %v587 = vmax.f32 %v571, 0.0
          %v588 = vmax.f32 %v572, 0.0
          %v589 = vmax.f32 %v573, 0.0
          %v590 = vmax.f32 %v574, 0.0
          %v591 = vmax.f32 %v575, 0.0
          %v592 = vmax.f32 %v576, 0.0
          %v593 = vmax.f32 %v577, 0.0
          %v594 = vmax.f32 %v578, 0.0
          %v595 = vmax.f32 %v579, 0.0
          %v596 = vmax.f32 %v580, 0.0
          %597 = vst [vmem:[%s273] sm:$0xff] %v581
          %598 = vst [vmem:[%s273 + $0x8] sm:$0xff] %v582
          %599 = vst [vmem:[%s273 + $0x10] sm:$0xff] %v583
          %600 = vst [vmem:[%s273 + $0x18] sm:$0xff] %v584
          %601 = vst [vmem:[%s273 + $0x20] sm:$0xff] %v585
          %602 = vst [vmem:[%s273 + $0x28] sm:$0xff] %v586
          %603 = vst [vmem:[%s273 + $0x30] sm:$0xff] %v587
          %604 = vst [vmem:[%s273 + $0x38] sm:$0xff] %v588
          %605 = vst [vmem:[%s273 + $0x40] sm:$0xff] %v589
          %606 = vst [vmem:[%s273 + $0x48] sm:$0xff] %v590
          %607 = vst [vmem:[%s273 + $0x50] sm:$0xff] %v591
          %608 = vst [vmem:[%s273 + $0x58] sm:$0xff] %v592
          %609 = vst [vmem:[%s273 + $0x60] sm:$0xff] %v593
          %610 = vst [vmem:[%s273 + $0x68] sm:$0xff] %v594
          %611 = vst [vmem:[%s273 + $0x70] sm:$0xff] %v595
          %612 = vst [vmem:[%s273 + $0x78] sm:$0xff] %v596
        $region48: #{tpu_custom_call.1} parent=35 // pred_fallthru
          _
        %s613 = sand.u32 %s156, 1
        %s614 = scalar_lea.sflag [#allocation4], %s613
        %s615 = sand.u32 %s156, 1
        %s616 = smul.addr %s615, 128
        %s617 = scalar_lea.vmem [#allocation5], %s616
        // Predicated region
        $region49: #{tpu_custom_call.1} parent=35 // pred_check
          %p618 = pneg %p166
        $region50: #{tpu_custom_call.1} parent=35 // pred_check_branch
          %620 = sbr.rel (%p618) target = $region52
        $region51: #{tpu_custom_call.1} parent=35 // pred_region
          %s621 = smul.u32 16, %s24
          %s623 = ssub.s32 2048, 2048
          %624 = vsyncadd %s614, %s623
          %s625 = sadd.s32 %s25, %s621
          %s626 = smul.addr %s625, 128
          %s627 = scalar_lea.hbm %s4, %s626
          %s628 = sshll.u32 %s617, 4
          %s629 = int_to_ptr.vmem [resolvable:$true] %s628
          %634 = dma.vmem_to_hbm [thread:$0]  %s629, 2048, %s627, %s614, 128, 128, 8
        $region52: #{tpu_custom_call.1} parent=35 // pred_fallthru
          _
      $region36: #{tpu_custom_call.1} parent=5 // pred_fallthru
        _
      %p635 = scmp.le.s32.totalorder 2, %s14
      // Predicated region
      $region53: #{tpu_custom_call.1} parent=5 // pred_check
        %p636 = pneg %p635
      $region54: #{tpu_custom_call.1} parent=5 // pred_check_branch
        %638 = sbr.rel (%p636) target = $region56
      $region55: #{tpu_custom_call.1} parent=5 // pred_region
        %s639 = ssub.s32 %s14, 2
        // Predicated region
        $region57: #{tpu_custom_call.1} parent=55 // pred_check
          %p640 = pneg %p172
        $region58: #{tpu_custom_call.1} parent=55 // pred_check_branch
          %642 = sbr.rel (%p640) target = $region60
        $region59: #{tpu_custom_call.1} parent=55 // pred_region
          %s643 = sand.u32 %s157, 1
          %s644 = scalar_lea.sflag [#allocation4], %s643
          %s645 = sand.u32 %s157, 1
          %s646 = smul.addr %s645, 128
          %s647 = scalar_lea.vmem [#allocation5], %s646
          %648 = dma.done %s644, 2048
        $region60: #{tpu_custom_call.1} parent=55 // pred_fallthru
          _
      $region56: #{tpu_custom_call.1} parent=5 // pred_fallthru
        _
    $region6: #{tpu_custom_call.1} parent=1 // loop_footer
      %s18 = sadd.s32 1, %s14
    $region7: #{tpu_custom_call.1} parent=1 // loop_footer_branch
      %13 = sbr.rel target = $region3
    $region8: #{tpu_custom_call.1} parent=1 // loop_exit
      _
    %649 = vsyncpa [#allocation3], 1
    %s650 = scalar_lea.sflag [#allocation3], 1
    %651 = vsyncpa %s650, 1
    %652 = vsyncpa [#allocation4], 1
    %s653 = scalar_lea.sflag [#allocation4], 1
    %654 = vsyncpa %s653, 1

</llo_original>
